<compile_context>
chip_gen: v7x
topology: tpu7x:2x2x1
jax: 0.10.0
libtpu: 0.0.40
codegen_flags: <defaults>
</compile_context>

<pallas_src>
import jax
import jax.numpy as jnp
from jax.experimental import pallas as pl
from jax.experimental.pallas import tpu as pltpu


def _round_up(n, m):
    return ((n + m - 1) // m) * m


def _vmem_capacity_bytes():
    """Physical VMEM per TensorCore; conservative v7x default if query fails."""
    try:
        return int(pltpu.get_tpu_info().vmem_capacity_bytes)
    except Exception:
        return 64 * 1024 * 1024  # v7x per-TC VMEM — safe on every generation


def lin_kernel(x_ref, w_ref, b_ref, o_ref):
    # x_ref: (TB, K), w_ref: (K, N), b_ref: (1, N), o_ref: (TB, N)
    z = jnp.dot(x_ref[...], w_ref[...], preferred_element_type=jnp.float32)
    z = z + b_ref[...].astype(jnp.float32)  # broadcast bias over batch rows
    # sigmoid with the divide pushed onto the EUP (approx vrcp) instead of a
    # VALU divide chain; |error| on outputs in (0, 1) is << 1e-3.
    o_ref[...] = pl.reciprocal(1.0 + jnp.exp(-z), approx=True).astype(o_ref.dtype)


def _pick_tile(n_rows, per_row_vmem_bytes, vmem_phys):
    """Batch tile (in packed rows): big enough to amortize the ~0.35us/step
    pipeline overhead (>= several MiB of x per step on large problems), small
    enough that the double-buffered, lane-padded x+out footprint stays within
    ~40% of physical VMEM, and split >= 2 ways so v7x megacore gets work."""
    budget = int(vmem_phys * 0.4)
    cap = max(8, (budget // per_row_vmem_bytes) // 8 * 8)
    if n_rows >= 4096:
        # Ensure at least 2 grid steps for v7x's 2 TensorCores; on single-TC
        # chips this costs at most one extra ~0.35us step (negligible here).
        return min(cap, _round_up(pl.cdiv(n_rows, 2), 8))
    return min(cap, _round_up(n_rows, 8))


def lin_forward(x, w_t, b, *, tile=None):
    """x: (B, D), w_t: (D, N), b: (1, N) -> sigmoid(x @ w_t + b), shape (B, N)."""
    B, D = x.shape
    N = w_t.shape[1]
    dt_size = jnp.dtype(x.dtype).itemsize

    # ---- lane-dense repack (wrapper-side layout plumbing, no extra compute) --
    pack = 128 // D if (D <= 128 and 128 % D == 0) else 1

    b_pad = _round_up(B, 8 * pack)  # packed row count becomes a multiple of 8
    if b_pad != B:
        x = jnp.pad(x, ((0, b_pad - B), (0, 0)))
    bp = b_pad // pack

    if pack > 1:
        xp = x.reshape(bp, pack * D)                       # contiguous reshape
        eye = jnp.eye(pack, dtype=w_t.dtype)
        # block-diagonal (pack*D, pack*N): block (p, p) = W^T
        wp = jnp.einsum("pq,dn->pdqn", eye, w_t).reshape(pack * D, pack * N)
        bb = jnp.tile(b, (1, pack))
    else:
        xp, wp, bb = x, w_t, b
    kp, np_ = pack * D, pack * N

    # VMEM accounting WITH lane padding: the x tile pads its last dim to a
    # multiple of 128 and the out tile pads N -> 128; both are double-buffered.
    per_row = 2 * (_round_up(kp, 128) + _round_up(np_, 128)) * dt_size
    vmem_phys = _vmem_capacity_bytes()
    if tile is None:
        tile = _pick_tile(bp, per_row, vmem_phys)
    tile = min(tile, bp)

    grid = (pl.cdiv(bp, tile),)

    out_p = pl.pallas_call(
        lin_kernel,
        out_shape=jax.ShapeDtypeStruct((bp, np_), x.dtype),
        grid_spec=pltpu.PrefetchScalarGridSpec(
            num_scalar_prefetch=0,
            grid=grid,
            in_specs=[
                pl.BlockSpec((tile, kp), lambda i: (i, 0)),   # packed x tile
                pl.BlockSpec((kp, np_), lambda i: (0, 0)),    # resident weight
                pl.BlockSpec((1, np_), lambda i: (0, 0)),     # resident bias
            ],
            out_specs=pl.BlockSpec((tile, np_), lambda i: (i, 0)),
        ),
        compiler_params=pltpu.CompilerParams(
            # Batch axis is independent -> shards across v7x's 2 TensorCores;
            # harmless no-op on single-TC v5e/v6e.
            dimension_semantics=("parallel",),
            # Scoped-VMEM limit sized to the padded, double-buffered footprint
            # plus headroom, per generation (v7x: ~38 MiB of 64; v6e/v5e:
            # ~77 MiB of 128).
            vmem_limit_bytes=min(int(vmem_phys * 0.6), 112 * 1024 * 1024),
        ),
        cost_estimate=pl.CostEstimate(
            flops=2 * b_pad * D * N,
            transcendentals=b_pad * N,
            bytes_accessed=(b_pad * D + kp * np_ + np_ + b_pad * N) * dt_size,
        ),
    )(xp, wp, bb)

    out = out_p.reshape(b_pad, N)
    return out[:B] if b_pad != B else out


def reference(x, w_t, b):
    return jax.nn.sigmoid(x @ w_t + b)


if __name__ == "__main__":
    key = jax.random.PRNGKey(0)
    kx, kw, kb, kx2, kx3, kw2, kb2, kx4 = jax.random.split(key, 8)

    D, N = 32, 2
    # Deterministic params mimicking nn.Linear's U(-1/sqrt(D), 1/sqrt(D)) init.
    bound = 1.0 / jnp.sqrt(jnp.float32(D))
    w = jax.random.uniform(kw, (N, D), jnp.float32, -bound, bound)
    b = jax.random.uniform(kb, (1, N), jnp.float32, -bound, bound)
    w_t = w.T  # (D, N) so the kernel computes x @ W^T directly

    tol = dict(atol=2e-3, rtol=2e-3)  # approx-reciprocal sigmoid epilogue

    # --- small single-block check (B=8 -> packed & padded to 8 packed rows) ---
    x = jax.random.normal(kx, (8, D), jnp.float32)
    out = lin_forward(x, w_t, b)
    jax.block_until_ready(out)
    assert out.shape == (8, N)
    assert jnp.allclose(out, reference(x, w_t, b), **tol)

    # --- multi-tile check (512 packed rows, tile=128 -> 4 grid steps) ---
    x2 = jax.random.normal(kx2, (2048, D), jnp.float32)
    out2 = lin_forward(x2, w_t, b, tile=128)
    jax.block_until_ready(out2)
    assert out2.shape == (2048, N)
    assert jnp.allclose(out2, reference(x2, w_t, b), **tol)

    # --- pad/slice path check (B not a multiple of pack*8) ---
    x3 = jax.random.normal(kx3, (1000, D), jnp.float32)
    out3 = lin_forward(x3, w_t, b)
    jax.block_until_ready(out3)
    assert out3.shape == (1000, N)
    assert jnp.allclose(out3, reference(x3, w_t, b), **tol)

    # --- unpacked fallback check (D=48 does not divide 128) ---
    D2 = 48
    bound2 = 1.0 / jnp.sqrt(jnp.float32(D2))
    w2 = jax.random.uniform(kw2, (N, D2), jnp.float32, -bound2, bound2)
    b2 = jax.random.uniform(kb2, (1, N), jnp.float32, -bound2, bound2)
    x4 = jax.random.normal(kx4, (16, D2), jnp.float32)
    out4 = lin_forward(x4, w2.T, b2)
    jax.block_until_ready(out4)
    assert out4.shape == (16, N)
    assert jnp.allclose(out4, reference(x4, w2.T, b2), **tol)

    print("KERNEL_OK")
</pallas_src>

<mosaic_0001>
module attributes {stable_mosaic.version = 11 : i64} {
  func.func @lin_kernel(%arg0: i32, %arg1: memref<8x128xf32, #tpu.memory_space<vmem>>, %arg2: memref<128x8xf32, #tpu.memory_space<vmem>>, %arg3: memref<1x8xf32, #tpu.memory_space<vmem>>, %arg4: memref<8x8xf32, #tpu.memory_space<vmem>>) attributes {dimension_semantics = [#tpu.dimension_semantics<parallel>], iteration_bounds = array<i64: 1>, scalar_prefetch = 0 : i64, scratch_operands = 0 : i64, tpu.core_type = #tpu.core_type<tc>, window_params = [{transform_indices = @transform_0, window_bounds = array<i64: 8, 128>}, {pipeline_mode = #tpu.pipeline_mode<synchronous>, transform_indices = @transform_1, window_bounds = array<i64: 128, 8>}, {pipeline_mode = #tpu.pipeline_mode<synchronous>, transform_indices = @transform_2, window_bounds = array<i64: 1, 8>}, {transform_indices = @transform_3, window_bounds = array<i64: 8, 8>}]} {
    %c0 = arith.constant 0 : index
    %c0_0 = arith.constant 0 : index
    %0 = vector.load %arg1[%c0, %c0_0] : memref<8x128xf32, #tpu.memory_space<vmem>>, vector<8x128xf32>
    %c0_1 = arith.constant 0 : index
    %c0_2 = arith.constant 0 : index
    %1 = vector.load %arg2[%c0_1, %c0_2] : memref<128x8xf32, #tpu.memory_space<vmem>>, vector<128x8xf32>
    %cst = arith.constant dense<0.000000e+00> : vector<8x8xf32>
    %2 = tpu.matmul %0, %1, %cst {dimension_numbers = #tpu.dot_dimension_numbers<[1], [0], [0], [1], [0, 0, 1, 1], [], []>} : vector<8x128xf32>, vector<128x8xf32>, vector<8x8xf32> -> vector<8x8xf32>
    %c0_3 = arith.constant 0 : index
    %c0_4 = arith.constant 0 : index
    %3 = vector.load %arg3[%c0_3, %c0_4] : memref<1x8xf32, #tpu.memory_space<vmem>>, vector<1x8xf32>
    %4 = vector.broadcast %3 : vector<1x8xf32> to vector<8x8xf32>
    %5 = arith.addf %2, %4 : vector<8x8xf32>
    %cst_5 = arith.constant 0.000000e+00 : f32
    %6 = vector.broadcast %cst_5 : f32 to vector<8x8xf32>
    %7 = arith.subf %6, %5 : vector<8x8xf32>
    %8 = math.exp %7 : vector<8x8xf32>
    %cst_6 = arith.constant 1.000000e+00 : f32
    %9 = vector.broadcast %cst_6 : f32 to vector<8x8xf32>
    %10 = arith.addf %9, %8 : vector<8x8xf32>
    %11 = tpu.reciprocal %10 {approx = true} : vector<8x8xf32> -> vector<8x8xf32>
    %c0_7 = arith.constant 0 : index
    %c0_8 = arith.constant 0 : index
    %12 = vector.load %arg4[%c0_7, %c0_8] : memref<8x8xf32, #tpu.memory_space<vmem>>, vector<8x8xf32>
    tpu.vector_store %arg4[%c0_7, %c0_8], %11 {strides = array<i32>} : memref<8x8xf32, #tpu.memory_space<vmem>>, vector<8x8xf32>,
    return
  }
  func.func @transform_0(%arg0: i32) -> (i32, i32) {
    %c0_i32 = arith.constant 0 : i32
    %c0_i32_0 = arith.constant 0 : i32
    return %arg0, %c0_i32 : i32, i32
  }
  func.func @transform_1(%arg0: i32) -> (i32, i32) {
    %c0_i32 = arith.constant 0 : i32
    %c0_i32_0 = arith.constant 0 : i32
    %c0_i32_1 = arith.constant 0 : i32
    return %c0_i32, %c0_i32_0 : i32, i32
  }
  func.func @transform_2(%arg0: i32) -> (i32, i32) {
    %c0_i32 = arith.constant 0 : i32
    %c0_i32_0 = arith.constant 0 : i32
    %c0_i32_1 = arith.constant 0 : i32
    return %c0_i32, %c0_i32_0 : i32, i32
  }
  func.func @transform_3(%arg0: i32) -> (i32, i32) {
    %c0_i32 = arith.constant 0 : i32
    %c0_i32_0 = arith.constant 0 : i32
    return %arg0, %c0_i32 : i32, i32
  }
}

</mosaic_0001>

<llo_original>
// kernel: tpu_custom_call.1
$region0: #{tpu_custom_call.1}
  #allocation0 [shape = 'u32[]', space=smem, size = 0x4, offset = 0x4, fixed_abs, tag = 'smem constant byte address 0x4 - core index']
  #allocation1 [shape = 'u32[144,128]{1,0:T(1,128)}', space=vmem, size = 0x12000, scoped, tag = 'internal scratch']
  %s0 = inlined_call_operand.vmem [shape: f32[8,128], index: 0, kind: input, shape index: {}]
  %s1 = inlined_call_operand.vmem [shape: f32[128,8], index: 1, kind: input, shape index: {}]
  %s2 = inlined_call_operand.vmem [shape: f32[1,8], index: 2, kind: input, shape index: {}]
  %s3 = inlined_call_operand.hbm [shape: f32[8,8], index: 3, kind: output, shape index: {}]
  %s4 = sld [smem:[#allocation0]]
  $region22: #{tpu_custom_call.1} parent=0
    _
  %s6 = ssub.s32 1, %s4
  %s7 = scalar_select 0, %s6, %s4
  $region1: #{tpu_custom_call.1} parent=0
    #allocation2 [shape = 'u8[4096]{0}', space=vmem, size = 0x1000, scoped, tag = 'output window, operand 0, single buffered']
    #allocation3 [shape = 's32[1]{0}', space=sflag, size = 0x4, scoped, tag = 'scoped memory for tpu_custom_call.1']
    %8 = vsyncpa [#allocation3], 0
    // Predicated region
    $region2: #{tpu_custom_call.1} parent=1 // pred_check
      _
    $region3: #{tpu_custom_call.1} parent=1 // pred_check_branch
      %10 = sbr.rel (0) target = $region5
    $region4: #{tpu_custom_call.1} parent=1 // pred_region
      _
    $region5: #{tpu_custom_call.1} parent=1 // pred_fallthru
      _
    // Predicated region
    $region6: #{tpu_custom_call.1} parent=1 // pred_check
      _
    $region7: #{tpu_custom_call.1} parent=1 // pred_check_branch
      %12 = sbr.rel (0) target = $region9
    $region8: #{tpu_custom_call.1} parent=1 // pred_region
      _
    $region9: #{tpu_custom_call.1} parent=1 // pred_fallthru
      _
    // Predicated region
    $region10: #{tpu_custom_call.1} parent=1 // pred_check
      _
    $region11: #{tpu_custom_call.1} parent=1 // pred_check_branch
      %14 = sbr.rel (0) target = $region13
    $region12: #{tpu_custom_call.1} parent=1 // pred_region
      _
    $region13: #{tpu_custom_call.1} parent=1 // pred_fallthru
      _
    %v15 = vld [vmem:[%s0] sm:$0xff]
    %v16 = vld [vmem:[%s1] sm:$0xff]
    %v17 = vld [vmem:[%s1 + $0x8] sm:$0xff]
    %v18 = vld [vmem:[%s1 + $0x10] sm:$0xff]
    %v19 = vld [vmem:[%s1 + $0x18] sm:$0xff]
    %v20 = vld [vmem:[%s1 + $0x20] sm:$0xff]
    %v21 = vld [vmem:[%s1 + $0x28] sm:$0xff]
    %v22 = vld [vmem:[%s1 + $0x30] sm:$0xff]
    %v23 = vld [vmem:[%s1 + $0x38] sm:$0xff]
    %v24 = vld [vmem:[%s1 + $0x40] sm:$0xff]
    %v25 = vld [vmem:[%s1 + $0x48] sm:$0xff]
    %v26 = vld [vmem:[%s1 + $0x50] sm:$0xff]
    %v27 = vld [vmem:[%s1 + $0x58] sm:$0xff]
    %v28 = vld [vmem:[%s1 + $0x60] sm:$0xff]
    %v29 = vld [vmem:[%s1 + $0x68] sm:$0xff]
    %v30 = vld [vmem:[%s1 + $0x70] sm:$0xff]
    %v31 = vld [vmem:[%s1 + $0x78] sm:$0xff]
    %v32 = vld [vmem:[%s2] sm:$0x1]
    %v34 = vlaneseq
    %v35 = vshrl.u32 %v34, 7
    %v36 = vsub.s32 0, %v35
    %v37 = vrot.slane %v32, %v36
    %39 = vmatprep.subr.mxu0 0.0
    %40 = vmatpush1.msra.mxu0 %v16
    %41 = vmatprep.subr.mxu0 0.0
    %42 = vmatpush1.msra.mxu0 %v17
    %43 = vmatprep.subr.mxu0 0.0
    %44 = vmatpush1.msra.mxu0 %v18
    %45 = vmatprep.subr.mxu0 0.0
    %46 = vmatpush1.msra.mxu0 %v19
    %47 = vmatprep.subr.mxu0 0.0
    %48 = vmatpush1.msra.mxu0 %v20
    %49 = vmatprep.subr.mxu0 0.0
    %50 = vmatpush1.msra.mxu0 %v21
    %51 = vmatprep.subr.mxu0 0.0
    %52 = vmatpush1.msra.mxu0 %v22
    %53 = vmatprep.subr.mxu0 0.0
    %54 = vmatpush1.msra.mxu0 %v23
    %55 = vmatprep.subr.mxu0 0.0
    %56 = vmatpush1.msra.mxu0 %v24
    %57 = vmatprep.subr.mxu0 0.0
    %58 = vmatpush1.msra.mxu0 %v25
    %59 = vmatprep.subr.mxu0 0.0
    %60 = vmatpush1.msra.mxu0 %v26
    %61 = vmatprep.subr.mxu0 0.0
    %62 = vmatpush1.msra.mxu0 %v27
    %63 = vmatprep.subr.mxu0 0.0
    %64 = vmatpush1.msra.mxu0 %v28
    %65 = vmatprep.subr.mxu0 0.0
    %66 = vmatpush1.msra.mxu0 %v29
    %67 = vmatprep.subr.mxu0 0.0
    %68 = vmatpush1.msra.mxu0 %v30
    %69 = vmatprep.subr.mxu0 0.0
    %70 = vmatpush1.msra.mxu0 %v31
    %71 = vmatprep.subr.mxu0 0.0
    %72 = vmatpush1.msra.mxu0 0.0
    %73 = vmatprep.subr.mxu0 0.0
    %74 = vmatpush1.msra.mxu0 0.0
    %75 = vmatprep.subr.mxu0 0.0
    %76 = vmatpush1.msra.mxu0 0.0
    %77 = vmatprep.subr.mxu0 0.0
    %78 = vmatpush1.msra.mxu0 0.0
    %79 = vmatprep.subr.mxu0 0.0
    %80 = vmatpush1.msra.mxu0 0.0
    %81 = vmatprep.subr.mxu0 0.0
    %82 = vmatpush1.msra.mxu0 0.0
    %83 = vmatprep.subr.mxu0 0.0
    %84 = vmatpush1.msra.mxu0 0.0
    %85 = vmatprep.subr.mxu0 0.0
    %86 = vmatpush1.msra.mxu0 0.0
    %87 = vmatprep.subr.mxu0 0.0
    %88 = vmatpush1.msra.mxu0 0.0
    %89 = vmatprep.subr.mxu0 0.0
    %90 = vmatpush1.msra.mxu0 0.0
    %91 = vmatprep.subr.mxu0 0.0
    %92 = vmatpush1.msra.mxu0 0.0
    %93 = vmatprep.subr.mxu0 0.0
    %94 = vmatpush1.msra.mxu0 0.0
    %95 = vmatprep.subr.mxu0 0.0
    %96 = vmatpush1.msra.mxu0 0.0
    %97 = vmatprep.subr.mxu0 0.0
    %98 = vmatpush1.msra.mxu0 0.0
    %99 = vmatprep.subr.mxu0 0.0
    %100 = vmatpush1.msra.mxu0 0.0
    %101 = vmatprep.subr.mxu0 0.0
    %102 = vmatpush1.msra.mxu0 0.0
    %103 = vmatprep.mubr.f32.mxu0 0.0
    %104 = vmatmul.mubr.f32.gmra.mrb[0].mxu0 %v15
    %v105 = vpop.f32.mrb[0].mxu0
    %v106 = vadd.f32 %v37, %v105
    %v107 = vpop.f32.mrb[0].mxu0
    %108 = vdwg.mxu0
    %v109 = vsub.f32 0.0, %v106
    %v110 = vmul.f32 %v109, 1.442695
    %v111 = vpow.pop %v110
    %v112 = vadd.f32 %v111, 1.0
    %v113 = vrcp.pop %v112
    %vm114 = vcmask 64512
    %115 = vst.msk [vmem:[#allocation2] sm:$0xff] %vm114, %v113
    // Predicated region
    $region14: #{tpu_custom_call.1} parent=1 // pred_check
      _
    $region15: #{tpu_custom_call.1} parent=1 // pred_check_branch
      %117 = sbr.rel (0) target = $region17
    $region16: #{tpu_custom_call.1} parent=1 // pred_region
      %s119 = ssub.s32 128, 128
      %120 = vsyncadd [#allocation3], %s119
      %s122 = sshll.u32 [#allocation2], 4
      %s123 = int_to_ptr.vmem [resolvable:$true] %s122
      %125 = dma.vmem_to_hbm [thread:$0]  %s123, 128, %s3, [#allocation3]
    $region17: #{tpu_custom_call.1} parent=1 // pred_fallthru
      _
    // Predicated region
    $region18: #{tpu_custom_call.1} parent=1 // pred_check
      _
    $region19: #{tpu_custom_call.1} parent=1 // pred_check_branch
      %127 = sbr.rel (0) target = $region21
    $region20: #{tpu_custom_call.1} parent=1 // pred_region
      %128 = dma.done [#allocation3], 128
    $region21: #{tpu_custom_call.1} parent=1 // pred_fallthru
      _
    %129 = vsyncpa [#allocation3], 1

</llo_original>
